<compile_context>
chip_gen: v5e
topology: v5e:2x2
jax: 0.10.0
libtpu: 0.0.40
codegen_flags: <defaults>
</compile_context>

<pallas_src>
import functools
import math

import jax
import jax.numpy as jnp
from jax.experimental import pallas as pl
from jax.experimental.pallas import tpu as pltpu


def _pad8(n):
    return ((n + 7) // 8) * 8


# ------------------------------ fused kernel ------------------------------- #

def ipn_fused_kernel(imf_ref, proto_ref, attr_ref, pa_ref, pb_ref, fcb_ref,
                     o_ref, *, dims, offs, thresh, temperature):
    att_dim, image_dim, att_hC, hidden_C = dims
    (o_slim_w, o_slim_b, o_g_att, o_g_img), (o_img_w, o_pw, o_pb, o_fcw) = offs
    f32 = jnp.float32

    # Static, sublane-aligned slices out of the two packed parameter slabs.
    slim_w  = pa_ref[o_slim_w:o_slim_w + image_dim, 0:att_dim]      # (Di, Da)
    slim_b  = pa_ref[o_slim_b:o_slim_b + 1,         0:att_dim]      # (1,  Da)
    g_att   = pa_ref[o_g_att:o_g_att + att_dim,     0:att_hC]       # (Da, Hc)
    g_img   = pa_ref[o_g_img:o_g_img + att_dim,     0:att_hC]       # (Da, Hc)
    img_w   = pb_ref[o_img_w:o_img_w + image_dim, :]                # (Di, H)
    proto_w = pb_ref[o_pw:o_pw + 2 * att_dim, :]                    # (2Da, H)
    proto_b = pb_ref[o_pb:o_pb + 1, :]                              # (1,  H)
    fc_w    = pb_ref[o_fcw:o_fcw + 1, :]                            # (1,  H)

    # proto_slim: Linear(image_dim -> att_dim), weight pre-transposed.
    proto_slim = (jnp.dot(proto_ref[...], slim_w, preferred_element_type=f32)
                  + slim_b)                                         # (C, Da)

    # Isometric propagation, both branches batched along a leading dim of 2.
    x = jnp.stack([attr_ref[...], proto_slim], axis=0)              # (2, C, Da)
    g = jnp.stack([g_att, g_img], axis=0)                           # (2, Da, Hc)

    p = jnp.einsum('bcd,bdh->bch', x, g, preferred_element_type=f32)  # (2,C,Hc)
    inv_norm = jax.lax.rsqrt(
        jnp.maximum(jnp.sum(p * p, axis=-1, keepdims=True), 1e-16))
    pn = p * inv_norm
    cos = jnp.einsum('bch,bkh->bck', pn, pn,
                     preferred_element_type=f32)                    # (2, C, C)
    raw = jnp.where(cos > thresh, cos, jnp.full_like(cos, -9.0e15))
    # Unstabilized softmax is safe: diagonal cos == 1 > thresh, so every row's
    # max logit is <= temperature (10) << f32 exp overflow; masked entries
    # underflow to exactly 0.
    e = jnp.exp(raw * temperature)
    att = e * pl.reciprocal(jnp.sum(e, axis=-1, keepdims=True), approx=True)
    outs = jnp.einsum('bck,bkd->bcd', att, x,
                      preferred_element_type=f32)                   # (2, C, Da)

    # torch.cat([att_outs, img_proto_outs], 1) @ proto_w as ONE K=2*Da matmul.
    outs_cat = jnp.concatenate([outs[0], outs[1]], axis=1)          # (C, 2Da)

    img_proj = jnp.dot(imf_ref[...], img_w,
                       preferred_element_type=f32)                  # (B, H)
    att_proj = (jnp.dot(outs_cat, proto_w, preferred_element_type=f32)
                + proto_b)                                          # (C, H)

    hidden = jnp.maximum(img_proj[:, None, :] + att_proj[None, :, :], 0.0)
    # fc(hidden_C -> 1): broadcast multiply + lane reduction, (B, C) written
    # directly (no N=1 matmul, no masked 1-lane stores, no wrapper reshape).
    logits = jnp.sum(hidden * fc_w[None, :, :], axis=-1) + fcb_ref[0, 0]
    o_ref[...] = logits.astype(o_ref.dtype)


# ------------------------------ param packing ------------------------------- #

def pack_params(params, att_dim, image_dim, att_hC, hidden_C):
    """Pack all weights/biases into 2 slabs (done once, outside the hot path)."""
    wa = max(att_dim, att_hC)
    o_slim_w = 0
    o_slim_b = _pad8(image_dim)
    o_g_att = o_slim_b + 8
    o_g_img = o_g_att + _pad8(att_dim)
    rows_a = o_g_img + _pad8(att_dim)

    slab_a = jnp.zeros((rows_a, wa), jnp.float32)
    slab_a = slab_a.at[o_slim_w:o_slim_w + image_dim, :att_dim].set(params["slim_w_t"])
    slab_a = slab_a.at[o_slim_b:o_slim_b + 1, :att_dim].set(params["slim_b"])
    slab_a = slab_a.at[o_g_att:o_g_att + att_dim, :att_hC].set(params["att_g_att"])
    slab_a = slab_a.at[o_g_img:o_g_img + att_dim, :att_hC].set(params["att_g_img"])

    o_img_w = 0
    o_pw = _pad8(image_dim)
    o_pb = o_pw + _pad8(2 * att_dim)
    o_fcw = o_pb + 8
    rows_b = o_fcw + 8

    slab_b = jnp.zeros((rows_b, hidden_C), jnp.float32)
    slab_b = slab_b.at[o_img_w:o_img_w + image_dim, :].set(params["img_w"])
    slab_b = slab_b.at[o_pw:o_pw + 2 * att_dim, :].set(params["proto_w"])
    slab_b = slab_b.at[o_pb:o_pb + 1, :].set(params["proto_b"])
    slab_b = slab_b.at[o_fcw:o_fcw + 1, :].set(
        params["fc_w_t"].reshape(1, hidden_C))

    fc_b = params["fc_b"].reshape(1, 1)
    offsets = ((o_slim_w, o_slim_b, o_g_att, o_g_img),
               (o_img_w, o_pw, o_pb, o_fcw))
    return (slab_a, slab_b, fc_b), offsets


# ----------------------------- forward ------------------------------------ #

def ipn_forward(packed, image_feats, img_proto, attributes, *,
                dims, offsets, temperature, thresh):
    slab_a, slab_b, fc_b = packed
    att_dim, image_dim, att_hC, hidden_C = dims
    batch = image_feats.shape[0]
    cls_num = attributes.shape[0]

    kernel = functools.partial(ipn_fused_kernel, dims=dims, offs=offsets,
                               thresh=thresh, temperature=temperature)

    flops = (2 * cls_num * image_dim * att_dim
             + 2 * (2 * cls_num * att_dim * att_hC
                    + 2 * cls_num * cls_num * att_hC
                    + 2 * cls_num * cls_num * att_dim)
             + 2 * batch * image_dim * hidden_C
             + 2 * cls_num * (2 * att_dim) * hidden_C
             + 5 * batch * cls_num * hidden_C)
    transcendentals = 2 * (cls_num * cls_num + 2 * cls_num)
    bytes_accessed = 4 * (image_feats.size + img_proto.size + attributes.size
                          + slab_a.size + slab_b.size + fc_b.size
                          + batch * cls_num)

    vmem = pltpu.MemorySpace.VMEM
    smem = pltpu.MemorySpace.SMEM

    # TODO(synk): if batch/cls_num grow, tile the scoring head over (batch, cls)
    # with a real parallel grid (v7x megacore) and a lane-dense logits slab.
    return pl.pallas_call(
        kernel,
        out_shape=jax.ShapeDtypeStruct((batch, cls_num), jnp.float32),
        in_specs=[pl.BlockSpec(memory_space=vmem),   # image_feats
                  pl.BlockSpec(memory_space=vmem),   # img_proto
                  pl.BlockSpec(memory_space=vmem),   # attributes
                  pl.BlockSpec(memory_space=vmem),   # slab_a (width att/hC)
                  pl.BlockSpec(memory_space=vmem),   # slab_b (width hidden_C)
                  pl.BlockSpec(memory_space=smem)],  # fc bias scalar
        out_specs=pl.BlockSpec(memory_space=vmem),
        cost_estimate=pl.CostEstimate(flops=flops,
                                      transcendentals=transcendentals,
                                      bytes_accessed=bytes_accessed),
    )(image_feats, img_proto, attributes, slab_a, slab_b, fc_b)


# --------------------- pure-JAX reference (for checking) ------------------- #

def ipn_reference(params, image_feats, img_proto, attributes, temperature, thresh):
    mm = functools.partial(jnp.matmul, precision=jax.lax.Precision.HIGHEST)
    slim = mm(img_proto, params["slim_w_t"]) + params["slim_b"]

    def prop(x, g):
        p = mm(x, g)
        pn = p / jnp.maximum(jnp.linalg.norm(p, axis=-1, keepdims=True), 1e-8)
        cos = mm(pn, pn.T)
        raw = jnp.where(cos > thresh, cos, -9.0e15)
        att = jax.nn.softmax(raw * temperature, axis=1)
        return mm(att, x)

    att_outs = prop(attributes, params["att_g_att"])
    img_outs = prop(slim, params["att_g_img"])
    outs = jnp.concatenate([att_outs, img_outs], axis=1)
    img_proj = mm(image_feats, params["img_w"])
    att_proj = mm(outs, params["proto_w"]) + params["proto_b"]
    hidden = jax.nn.relu(img_proj[:, None, :] + att_proj[None, :, :])
    return jnp.sum(hidden * params["fc_w_t"][:, 0], axis=-1) + params["fc_b"][0, 0]


# ----------------------------- parameters ---------------------------------- #

def init_params(key, att_dim, image_dim, att_hC, hidden_C):
    """Deterministic synthetic init (kaiming-uniform-like bounds)."""
    ks = jax.random.split(key, 9)

    def u(k, shape, bound):
        return jax.random.uniform(k, shape, jnp.float32, -bound, bound)

    return {
        "att_g_att": u(ks[0], (att_dim, att_hC), 1.0 / math.sqrt(att_hC)),
        "att_g_img": u(ks[1], (att_dim, att_hC), 1.0 / math.sqrt(att_hC)),
        # torch Linear(image_dim, att_dim) stores weight (att_dim, image_dim);
        # kept pre-transposed as (image_dim, att_dim) for x @ W.
        "slim_w_t": u(ks[2], (image_dim, att_dim), 1.0 / math.sqrt(image_dim)),
        "slim_b":   u(ks[3], (1, att_dim),         1.0 / math.sqrt(image_dim)),
        "img_w":    u(ks[4], (image_dim, hidden_C),   1.0 / math.sqrt(hidden_C)),
        "proto_w":  u(ks[5], (2 * att_dim, hidden_C), 1.0 / math.sqrt(hidden_C)),
        "proto_b":  u(ks[6], (1, hidden_C),           1.0 / math.sqrt(hidden_C)),
        # torch Linear(hidden_C, 1) weight is (1, hidden_C); stored transposed.
        "fc_w_t":   u(ks[7], (hidden_C, 1), 1.0 / math.sqrt(hidden_C)),
        "fc_b":     u(ks[8], (1, 1),        1.0 / math.sqrt(hidden_C)),
    }


# ------------------------------- main --------------------------------------- #

if __name__ == "__main__":
    # module hyper-params (small, TPU-friendly)
    att_dim, image_dim, att_hC, hidden_C = 32, 64, 32, 64
    T, degree = 10.0, 80
    thresh = math.cos(math.pi * degree / 180.0)
    cls_num, batch = 8, 8

    key = jax.random.PRNGKey(0)
    kp, k1, k2, k3 = jax.random.split(key, 4)
    params = init_params(kp, att_dim, image_dim, att_hC, hidden_C)

    image_feats = jax.random.normal(k1, (batch, image_dim), jnp.float32)
    img_proto = jax.random.normal(k2, (cls_num, image_dim), jnp.float32)
    attributes = jax.random.normal(k3, (cls_num, att_dim), jnp.float32)

    packed, offsets = pack_params(params, att_dim, image_dim, att_hC, hidden_C)
    dims = (att_dim, image_dim, att_hC, hidden_C)

    # NOTE: the 4th forward arg of the PyTorch module is unused -> dropped.
    fwd = jax.jit(functools.partial(ipn_forward, dims=dims, offsets=offsets,
                                    temperature=T, thresh=thresh))
    out = jax.block_until_ready(fwd(packed, image_feats, img_proto, attributes))

    ref = ipn_reference(params, image_feats, img_proto, attributes, T, thresh)

    assert out.shape == (batch, cls_num)
    assert bool(jnp.all(jnp.isfinite(out)))
    max_err = float(jnp.max(jnp.abs(out - ref)))
    assert bool(jnp.allclose(out, ref, atol=2e-2, rtol=2e-2)), max_err

    print("KERNEL_OK")
</pallas_src>

<mosaic_0001>
module attributes {stable_mosaic.version = 11 : i64} {
  func.func @ipn_fused_kernel(%arg0: memref<8x64xf32, #tpu.memory_space<vmem>>, %arg1: memref<8x64xf32, #tpu.memory_space<vmem>>, %arg2: memref<8x32xf32, #tpu.memory_space<vmem>>, %arg3: memref<136x32xf32, #tpu.memory_space<vmem>>, %arg4: memref<144x64xf32, #tpu.memory_space<vmem>>, %arg5: memref<1x1xf32, #tpu.memory_space<smem>>, %arg6: memref<8x8xf32, #tpu.memory_space<vmem>>) attributes {dimension_semantics = [], scalar_prefetch = 0 : i64, scratch_operands = 0 : i64, tpu.core_type = #tpu.core_type<tc>} {
    %c0 = arith.constant 0 : index
    %c0_0 = arith.constant 0 : index
    %0 = vector.load %arg3[%c0, %c0_0] : memref<136x32xf32, #tpu.memory_space<vmem>>, vector<64x32xf32>
    %c64 = arith.constant 64 : index
    %c0_1 = arith.constant 0 : index
    %1 = vector.load %arg3[%c64, %c0_1] : memref<136x32xf32, #tpu.memory_space<vmem>>, vector<1x32xf32>
    %c72 = arith.constant 72 : index
    %c0_2 = arith.constant 0 : index
    %2 = vector.load %arg3[%c72, %c0_2] : memref<136x32xf32, #tpu.memory_space<vmem>>, vector<32x32xf32>
    %c104 = arith.constant 104 : index
    %c0_3 = arith.constant 0 : index
    %3 = vector.load %arg3[%c104, %c0_3] : memref<136x32xf32, #tpu.memory_space<vmem>>, vector<32x32xf32>
    %c0_4 = arith.constant 0 : index
    %c0_5 = arith.constant 0 : index
    %4 = vector.load %arg4[%c0_4, %c0_5] : memref<144x64xf32, #tpu.memory_space<vmem>>, vector<64x64xf32>
    %c64_6 = arith.constant 64 : index
    %c0_7 = arith.constant 0 : index
    %5 = vector.load %arg4[%c64_6, %c0_7] : memref<144x64xf32, #tpu.memory_space<vmem>>, vector<64x64xf32>
    %c128 = arith.constant 128 : index
    %c0_8 = arith.constant 0 : index
    %6 = vector.load %arg4[%c128, %c0_8] : memref<144x64xf32, #tpu.memory_space<vmem>>, vector<1x64xf32>
    %c136 = arith.constant 136 : index
    %c0_9 = arith.constant 0 : index
    %7 = vector.load %arg4[%c136, %c0_9] : memref<144x64xf32, #tpu.memory_space<vmem>>, vector<1x64xf32>
    %c0_10 = arith.constant 0 : index
    %c0_11 = arith.constant 0 : index
    %8 = vector.load %arg1[%c0_10, %c0_11] : memref<8x64xf32, #tpu.memory_space<vmem>>, vector<8x64xf32>
    %cst = arith.constant dense<0.000000e+00> : vector<8x32xf32>
    %9 = tpu.matmul %8, %0, %cst {dimension_numbers = #tpu.dot_dimension_numbers<[1], [0], [0], [1], [0, 0, 1, 1], [], []>} : vector<8x64xf32>, vector<64x32xf32>, vector<8x32xf32> -> vector<8x32xf32>
    %10 = vector.broadcast %1 : vector<1x32xf32> to vector<8x32xf32>
    %11 = arith.addf %9, %10 : vector<8x32xf32>
    %c0_12 = arith.constant 0 : index
    %c0_13 = arith.constant 0 : index
    %12 = vector.load %arg2[%c0_12, %c0_13] : memref<8x32xf32, #tpu.memory_space<vmem>>, vector<8x32xf32>
    %13 = vector.shape_cast %12 : vector<8x32xf32> to vector<1x8x32xf32>
    %14 = vector.shape_cast %11 : vector<8x32xf32> to vector<1x8x32xf32>
    %15 = tpu.concatenate %13, %14 in 0 : vector<1x8x32xf32>, vector<1x8x32xf32> -> vector<2x8x32xf32>
    %16 = vector.shape_cast %2 : vector<32x32xf32> to vector<1x32x32xf32>
    %17 = vector.shape_cast %3 : vector<32x32xf32> to vector<1x32x32xf32>
    %18 = tpu.concatenate %16, %17 in 0 : vector<1x32x32xf32>, vector<1x32x32xf32> -> vector<2x32x32xf32>
    "tpu.trace_start"() <{level = 10 : i32, message = "bcd,bdh->bch"}> : () -> ()
    %cst_14 = arith.constant dense<0.000000e+00> : vector<2x8x32xf32>
    %19 = tpu.matmul %15, %18, %cst_14 {dimension_numbers = #tpu.dot_dimension_numbers<[2], [1], [1], [2], [0, 0, 0, 1, 1, 2], [0], [0]>} : vector<2x8x32xf32>, vector<2x32x32xf32>, vector<2x8x32xf32> -> vector<2x8x32xf32>
    "tpu.trace_stop"() : () -> ()
    %20 = arith.mulf %19, %19 : vector<2x8x32xf32>
    %cst_15 = arith.constant dense<0.000000e+00> : vector<2x8xf32>
    %21 = vector.multi_reduction <add>, %20, %cst_15 [2] : vector<2x8x32xf32> to vector<2x8xf32>
    %22 = vector.shape_cast %21 : vector<2x8xf32> to vector<2x8x1xf32>
    %cst_16 = arith.constant 1.000000e-16 : f32
    %23 = vector.broadcast %cst_16 : f32 to vector<2x8x1xf32>
    %24 = arith.maximumf %22, %23 : vector<2x8x1xf32>
    %25 = math.rsqrt %24 : vector<2x8x1xf32>
    %26 = vector.broadcast %25 : vector<2x8x1xf32> to vector<2x8x32xf32>
    %27 = arith.mulf %19, %26 : vector<2x8x32xf32>
    "tpu.trace_start"() <{level = 10 : i32, message = "bch,bkh->bck"}> : () -> ()
    %cst_17 = arith.constant dense<0.000000e+00> : vector<2x8x8xf32>
    %28 = tpu.matmul %27, %27, %cst_17 {dimension_numbers = #tpu.dot_dimension_numbers<[2], [2], [1], [1], [0, 0, 0, 1, 1, 1], [0], [0]>} : vector<2x8x32xf32>, vector<2x8x32xf32>, vector<2x8x8xf32> -> vector<2x8x8xf32>
    %cst_18 = arith.constant 0.173648179 : f32
    "tpu.trace_stop"() : () -> ()
    %29 = vector.broadcast %cst_18 : f32 to vector<2x8x8xf32>
    %30 = arith.cmpf ogt, %28, %29 : vector<2x8x8xf32>
    %cst_19 = arith.constant -9.000000e+15 : f32
    %31 = vector.broadcast %cst_19 : f32 to vector<2x8x8xf32>
    %32 = arith.select %30, %28, %31 : vector<2x8x8xi1>, vector<2x8x8xf32>
    %cst_20 = arith.constant 1.000000e+01 : f32
    %33 = vector.broadcast %cst_20 : f32 to vector<2x8x8xf32>
    %34 = arith.mulf %32, %33 : vector<2x8x8xf32>
    %35 = math.exp %34 : vector<2x8x8xf32>
    %cst_21 = arith.constant dense<0.000000e+00> : vector<2x8xf32>
    %36 = vector.multi_reduction <add>, %35, %cst_21 [2] : vector<2x8x8xf32> to vector<2x8xf32>
    %37 = vector.shape_cast %36 : vector<2x8xf32> to vector<2x8x1xf32>
    %38 = tpu.reciprocal %37 {approx = true} : vector<2x8x1xf32> -> vector<2x8x1xf32>
    %39 = vector.broadcast %38 : vector<2x8x1xf32> to vector<2x8x8xf32>
    %40 = arith.mulf %35, %39 : vector<2x8x8xf32>
    "tpu.trace_start"() <{level = 10 : i32, message = "bck,bkd->bcd"}> : () -> ()
    %cst_22 = arith.constant dense<0.000000e+00> : vector<2x8x32xf32>
    %41 = tpu.matmul %40, %15, %cst_22 {dimension_numbers = #tpu.dot_dimension_numbers<[2], [1], [1], [2], [0, 0, 0, 1, 1, 2], [0], [0]>} : vector<2x8x8xf32>, vector<2x8x32xf32>, vector<2x8x32xf32> -> vector<2x8x32xf32>
    "tpu.trace_stop"() : () -> ()
    %42 = vector.extract_strided_slice %41 {offsets = [0, 0, 0], sizes = [1, 8, 32], strides = [1, 1, 1]} : vector<2x8x32xf32> to vector<1x8x32xf32>
    %43 = vector.shape_cast %42 : vector<1x8x32xf32> to vector<8x32xf32>
    %44 = vector.extract_strided_slice %41 {offsets = [1, 0, 0], sizes = [1, 8, 32], strides = [1, 1, 1]} : vector<2x8x32xf32> to vector<1x8x32xf32>
    %45 = vector.shape_cast %44 : vector<1x8x32xf32> to vector<8x32xf32>
    %46 = tpu.concatenate %43, %45 in 1 : vector<8x32xf32>, vector<8x32xf32> -> vector<8x64xf32>
    %c0_23 = arith.constant 0 : index
    %c0_24 = arith.constant 0 : index
    %47 = vector.load %arg0[%c0_23, %c0_24] : memref<8x64xf32, #tpu.memory_space<vmem>>, vector<8x64xf32>
    %cst_25 = arith.constant dense<0.000000e+00> : vector<8x64xf32>
    %48 = tpu.matmul %47, %4, %cst_25 {dimension_numbers = #tpu.dot_dimension_numbers<[1], [0], [0], [1], [0, 0, 1, 1], [], []>} : vector<8x64xf32>, vector<64x64xf32>, vector<8x64xf32> -> vector<8x64xf32>
    %cst_26 = arith.constant dense<0.000000e+00> : vector<8x64xf32>
    %49 = tpu.matmul %46, %5, %cst_26 {dimension_numbers = #tpu.dot_dimension_numbers<[1], [0], [0], [1], [0, 0, 1, 1], [], []>} : vector<8x64xf32>, vector<64x64xf32>, vector<8x64xf32> -> vector<8x64xf32>
    %50 = vector.broadcast %6 : vector<1x64xf32> to vector<8x64xf32>
    %51 = arith.addf %49, %50 : vector<8x64xf32>
    %52 = vector.shape_cast %48 : vector<8x64xf32> to vector<8x1x64xf32>
    %53 = vector.shape_cast %51 : vector<8x64xf32> to vector<1x8x64xf32>
    %54 = vector.broadcast %52 : vector<8x1x64xf32> to vector<8x8x64xf32>
    %55 = vector.broadcast %53 : vector<1x8x64xf32> to vector<8x8x64xf32>
    %56 = arith.addf %54, %55 : vector<8x8x64xf32>
    %cst_27 = arith.constant 0.000000e+00 : f32
    %57 = vector.broadcast %cst_27 : f32 to vector<8x8x64xf32>
    %58 = arith.maximumf %56, %57 : vector<8x8x64xf32>
    %59 = vector.shape_cast %7 : vector<1x64xf32> to vector<1x1x64xf32>
    %60 = vector.broadcast %59 : vector<1x1x64xf32> to vector<8x8x64xf32>
    %61 = arith.mulf %58, %60 : vector<8x8x64xf32>
    %cst_28 = arith.constant dense<0.000000e+00> : vector<8x8xf32>
    %62 = vector.multi_reduction <add>, %61, %cst_28 [2] : vector<8x8x64xf32> to vector<8x8xf32>
    %c0_29 = arith.constant 0 : index
    %c0_30 = arith.constant 0 : index
    %63 = memref.load %arg5[%c0_29, %c0_30] : memref<1x1xf32, #tpu.memory_space<smem>>
    %64 = vector.broadcast %63 : f32 to vector<8x8xf32>
    %65 = arith.addf %62, %64 : vector<8x8xf32>
    %c0_31 = arith.constant 0 : index
    %c0_32 = arith.constant 0 : index
    %66 = vector.load %arg6[%c0_31, %c0_32] : memref<8x8xf32, #tpu.memory_space<vmem>>, vector<8x8xf32>
    tpu.vector_store %arg6[%c0_31, %c0_32], %65 {strides = array<i32>} : memref<8x8xf32, #tpu.memory_space<vmem>>, vector<8x8xf32>,
    return
  }
}

</mosaic_0001>

<llo_original>
// kernel: ipn_forward.1
$region0: #{ipn_forward.1}
  #allocation0 [shape = 'u32[]', space=smem, size = 0x4, offset = 0x4, fixed_abs, tag = 'smem constant byte address 0x4 - core index']
  #allocation1 [shape = 'u32[72,128]{1,0:T(1,128)}', space=vmem, size = 0x9000, scoped, tag = 'internal scratch']
  #allocation2 [shape = 'f32[1,1]{1,0:T(1,128)S(6)}', space=smem, size = 0x200, scoped, tag = 'scoped memory for ipn_forward.1']
  %s0 = inlined_call_operand.vmem [shape: f32[8,64], index: 0, kind: input, shape index: {}]
  %s1 = inlined_call_operand.vmem [shape: f32[8,64], index: 1, kind: input, shape index: {}]
  %s2 = inlined_call_operand.vmem [shape: f32[8,32], index: 2, kind: input, shape index: {}]
  %s3 = inlined_call_operand.vmem [shape: f32[136,32], index: 3, kind: input, shape index: {}]
  %s4 = inlined_call_operand.vmem [shape: f32[144,64], index: 4, kind: input, shape index: {}]
  %s5 = inlined_call_operand.<no memory space> [shape: f32[1,1], index: 5, kind: input, shape index: {}]
  %s6 = inlined_call_operand.hbm [shape: f32[8,8], index: 6, kind: output, shape index: {}]
  %s7 = sld [smem:[#allocation0]]
  $region34: #{ipn_forward.1} parent=0
    _
  %s9 = ssub.s32 1, %s7
  %s10 = scalar_select 0, %s9, %s7
  %11 = sst [smem:[#allocation2]] %s5
  $region1: #{ipn_forward.1} parent=0
    #allocation3 [shape = 'u8[4096]{0}', space=vmem, size = 0x1000, scoped, tag = 'output window, operand 0, single buffered']
    #allocation4 [shape = 's32[1]{0}', space=sflag, size = 0x4, scoped, tag = 'scoped memory for ipn_forward.1']
    %12 = vsyncpa [#allocation4], 0
    // Predicated region
    $region2: #{ipn_forward.1} parent=1 // pred_check
      _
    $region3: #{ipn_forward.1} parent=1 // pred_check_branch
      %14 = sbr.rel (0) target = $region5
    $region4: #{ipn_forward.1} parent=1 // pred_region
      _
    $region5: #{ipn_forward.1} parent=1 // pred_fallthru
      _
    // Predicated region
    $region6: #{ipn_forward.1} parent=1 // pred_check
      _
    $region7: #{ipn_forward.1} parent=1 // pred_check_branch
      %16 = sbr.rel (0) target = $region9
    $region8: #{ipn_forward.1} parent=1 // pred_region
      _
    $region9: #{ipn_forward.1} parent=1 // pred_fallthru
      _
    // Predicated region
    $region10: #{ipn_forward.1} parent=1 // pred_check
      _
    $region11: #{ipn_forward.1} parent=1 // pred_check_branch
      %18 = sbr.rel (0) target = $region13
    $region12: #{ipn_forward.1} parent=1 // pred_region
      _
    $region13: #{ipn_forward.1} parent=1 // pred_fallthru
      _
    // Predicated region
    $region14: #{ipn_forward.1} parent=1 // pred_check
      _
    $region15: #{ipn_forward.1} parent=1 // pred_check_branch
      %20 = sbr.rel (0) target = $region17
    $region16: #{ipn_forward.1} parent=1 // pred_region
      _
    $region17: #{ipn_forward.1} parent=1 // pred_fallthru
      _
    // Predicated region
    $region18: #{ipn_forward.1} parent=1 // pred_check
      _
    $region19: #{ipn_forward.1} parent=1 // pred_check_branch
      %22 = sbr.rel (0) target = $region21
    $region20: #{ipn_forward.1} parent=1 // pred_region
      _
    $region21: #{ipn_forward.1} parent=1 // pred_fallthru
      _
    // Predicated region
    $region22: #{ipn_forward.1} parent=1 // pred_check
      _
    $region23: #{ipn_forward.1} parent=1 // pred_check_branch
      %24 = sbr.rel (0) target = $region25
    $region24: #{ipn_forward.1} parent=1 // pred_region
      _
    $region25: #{ipn_forward.1} parent=1 // pred_fallthru
      _
    %v25 = vld [vmem:[%s3] sm:$0xff]
    %v26 = vld [vmem:[%s3 + $0x8] sm:$0xff]
    %v27 = vld [vmem:[%s3 + $0x10] sm:$0xff]
    %v28 = vld [vmem:[%s3 + $0x18] sm:$0xff]
    %v29 = vld [vmem:[%s3 + $0x20] sm:$0xff]
    %v30 = vld [vmem:[%s3 + $0x28] sm:$0xff]
    %v31 = vld [vmem:[%s3 + $0x30] sm:$0xff]
    %v32 = vld [vmem:[%s3 + $0x38] sm:$0xff]
    %v33 = vld [vmem:[%s3 + $0x40] sm:$0x1]
    %v34 = vld [vmem:[%s3 + $0x48] sm:$0xff]
    %v35 = vld [vmem:[%s3 + $0x50] sm:$0xff]
    %v36 = vld [vmem:[%s3 + $0x58] sm:$0xff]
    %v37 = vld [vmem:[%s3 + $0x60] sm:$0xff]
    %v38 = vld [vmem:[%s3 + $0x68] sm:$0xff]
    %v39 = vld [vmem:[%s3 + $0x70] sm:$0xff]
    %v40 = vld [vmem:[%s3 + $0x78] sm:$0xff]
    %v41 = vld [vmem:[%s3 + $0x80] sm:$0xff]
    %v42 = vld [vmem:[%s4] sm:$0xff]
    %v43 = vld [vmem:[%s4 + $0x8] sm:$0xff]
    %v44 = vld [vmem:[%s4 + $0x10] sm:$0xff]
    %v45 = vld [vmem:[%s4 + $0x18] sm:$0xff]
    %v46 = vld [vmem:[%s4 + $0x20] sm:$0xff]
    %v47 = vld [vmem:[%s4 + $0x28] sm:$0xff]
    %v48 = vld [vmem:[%s4 + $0x30] sm:$0xff]
    %v49 = vld [vmem:[%s4 + $0x38] sm:$0xff]
    %v50 = vld [vmem:[%s4 + $0x40] sm:$0xff]
    %v51 = vld [vmem:[%s4 + $0x48] sm:$0xff]
    %v52 = vld [vmem:[%s4 + $0x50] sm:$0xff]
    %v53 = vld [vmem:[%s4 + $0x58] sm:$0xff]
    %v54 = vld [vmem:[%s4 + $0x60] sm:$0xff]
    %v55 = vld [vmem:[%s4 + $0x68] sm:$0xff]
    %v56 = vld [vmem:[%s4 + $0x70] sm:$0xff]
    %v57 = vld [vmem:[%s4 + $0x78] sm:$0xff]
    %v58 = vld [vmem:[%s4 + $0x80] sm:$0x1]
    %v59 = vld [vmem:[%s4 + $0x88] sm:$0x1]
    %v60 = vld [vmem:[%s1] sm:$0xff]
    %v61 = vperm.slane %v33, 0
    %vm62 = vcmask 523264
    %v64 = vsel %vm62, %v60, 0
    %66 = vmatpush.msra.mxu0 0.0
    %67 = vmatpush.msra.mxu0 0.0
    %68 = vmatpush.msra.mxu0 0.0
    %69 = vmatpush.msra.mxu0 0.0
    %70 = vmatpush.msra.mxu0 0.0
    %71 = vmatpush.msra.mxu0 0.0
    %72 = vmatpush.msra.mxu0 0.0
    %73 = vmatpush.msra.mxu0 0.0
    %74 = vmatpush.msra.mxu0 %v32
    %75 = vmatpush.msra.mxu0 %v31
    %76 = vmatpush.msra.mxu0 %v30
    %77 = vmatpush.msra.mxu0 %v29
    %78 = vmatpush.msra.mxu0 %v28
    %79 = vmatpush.msra.mxu0 %v27
    %80 = vmatpush.msra.mxu0 %v26
    %81 = vmatpush.msra.mxu0 %v25
    %82 = vmatmul.f32.gmra.mxu0 %v64
    %v83 = vpop.f32.mrf.mxu0
    %v84 = vadd.f32 %v61, %v83
    %85 = vdwg.mxu0
    %v86 = vld [vmem:[%s2] sm:$0xff]
    %vm87 = vcmask 261120
    %v89 = vsel %vm87, %v86, 0
    %91 = vmatpush.msra.mxu0 0.0
    %92 = vmatpush.msra.mxu0 0.0
    %93 = vmatpush.msra.mxu0 0.0
    %94 = vmatpush.msra.mxu0 0.0
    %95 = vmatpush.msra.mxu0 0.0
    %96 = vmatpush.msra.mxu0 0.0
    %97 = vmatpush.msra.mxu0 0.0
    %98 = vmatpush.msra.mxu0 0.0
    %99 = vmatpush.msra.mxu0 0.0
    %100 = vmatpush.msra.mxu0 0.0
    %101 = vmatpush.msra.mxu0 0.0
    %102 = vmatpush.msra.mxu0 0.0
    %103 = vmatpush.msra.mxu0 %v37
    %104 = vmatpush.msra.mxu0 %v36
    %105 = vmatpush.msra.mxu0 %v35
    %106 = vmatpush.msra.mxu0 %v34
    %107 = vmatmul.f32.gmra.mxu0 %v89
    %v108 = vpop.f32.mrf.mxu0
    %v109 = vadd.f32 0.0, %v108
    %110 = vdwg.mxu0
    %v112 = vsel %vm87, %v84, 0
    %114 = vmatpush.msra.mxu0 0.0
    %115 = vmatpush.msra.mxu0 0.0
    %116 = vmatpush.msra.mxu0 0.0
    %117 = vmatpush.msra.mxu0 0.0
    %118 = vmatpush.msra.mxu0 0.0
    %119 = vmatpush.msra.mxu0 0.0
    %120 = vmatpush.msra.mxu0 0.0
    %121 = vmatpush.msra.mxu0 0.0
    %122 = vmatpush.msra.mxu0 0.0
    %123 = vmatpush.msra.mxu0 0.0
    %124 = vmatpush.msra.mxu0 0.0
    %125 = vmatpush.msra.mxu0 0.0
    %126 = vmatpush.msra.mxu0 %v41
    %127 = vmatpush.msra.mxu0 %v40
    %128 = vmatpush.msra.mxu0 %v39
    %129 = vmatpush.msra.mxu0 %v38
    %130 = vmatmul.f32.gmra.mxu0 %v112
    %v131 = vpop.f32.mrf.mxu0
    %v132 = vadd.f32 0.0, %v131
    %133 = vdwg.mxu0
    %v134 = vmul.f32 %v109, %v109
    %v135 = vmul.f32 %v132, %v132
    %v136 = vsel %vm87, %v134, 0.0
    %137 = vadd.xlane.f32.xlu0 %v136
    %v138 = vpop.xlane.xlu0 %137
    %v139 = vsel %vm87, %v135, 0.0
    %140 = vadd.xlane.f32.xlu0 %v139
    %v141 = vpop.xlane.xlu0 %140
    %v142 = vmax.f32 %v138, 1e-16
    %v143 = vmax.f32 %v141, 1e-16
    %v144 = vrsqrt.pop %v142
    %v145 = vmul.f32 %v144, %v142
    %v146 = vmul.f32 %v145, %v144
    %v147 = vmul.f32 0.5, %v146
    %v148 = vsub.f32 1.5, %v147
    %v149 = vmul.f32 %v144, %v148
    %vm150 = vweird.f32 %v142
    %vm151 = vweird.f32 %v144
    %vm152 = vmor %vm150, %vm151
    %v153 = vsel %vm152, %v144, %v149
    %v154 = vrsqrt.pop %v143
    %v155 = vmul.f32 %v154, %v143
    %v156 = vmul.f32 %v155, %v154
    %v157 = vmul.f32 0.5, %v156
    %v158 = vsub.f32 1.5, %v157
    %v159 = vmul.f32 %v154, %v158
    %vm160 = vweird.f32 %v143
    %vm161 = vweird.f32 %v154
    %vm162 = vmor %vm160, %vm161
    %v163 = vsel %vm162, %v154, %v159
    %v164 = vmul.f32 %v109, %v153
    %v165 = vmul.f32 %v132, %v163
    %v167 = vsel %vm87, %v164, 0
    %169 = vmatpush.xpose.msra.mxu0 0.0
    %170 = vmatpush.xpose.msra.mxu0 0.0
    %171 = vmatpush.xpose.msra.mxu0 0.0
    %172 = vmatpush.xpose.msra.mxu0 0.0
    %173 = vmatpush.xpose.msra.mxu0 0.0
    %174 = vmatpush.xpose.msra.mxu0 0.0
    %175 = vmatpush.xpose.msra.mxu0 0.0
    %176 = vmatpush.xpose.msra.mxu0 0.0
    %177 = vmatpush.xpose.msra.mxu0 0.0
    %178 = vmatpush.xpose.msra.mxu0 0.0
    %179 = vmatpush.xpose.msra.mxu0 0.0
    %180 = vmatpush.xpose.msra.mxu0 0.0
    %181 = vmatpush.xpose.msra.mxu0 0.0
    %182 = vmatpush.xpose.msra.mxu0 0.0
    %183 = vmatpush.xpose.msra.mxu0 0.0
    %184 = vmatpush.xpose.msra.mxu0 %v167
    %185 = vmatmul.f32.gmra.mxu0 %v167
    %v186 = vpop.f32.mrf.mxu0
    %v187 = vadd.f32 0.0, %v186
    %188 = vdwg.mxu0
    %v190 = vsel %vm87, %v165, 0
    %192 = vmatpush.xpose.msra.mxu0 0.0
    %193 = vmatpush.xpose.msra.mxu0 0.0
    %194 = vmatpush.xpose.msra.mxu0 0.0
    %195 = vmatpush.xpose.msra.mxu0 0.0
    %196 = vmatpush.xpose.msra.mxu0 0.0
    %197 = vmatpush.xpose.msra.mxu0 0.0
    %198 = vmatpush.xpose.msra.mxu0 0.0
    %199 = vmatpush.xpose.msra.mxu0 0.0
    %200 = vmatpush.xpose.msra.mxu0 0.0
    %201 = vmatpush.xpose.msra.mxu0 0.0
    %202 = vmatpush.xpose.msra.mxu0 0.0
    %203 = vmatpush.xpose.msra.mxu0 0.0
    %204 = vmatpush.xpose.msra.mxu0 0.0
    %205 = vmatpush.xpose.msra.mxu0 0.0
    %206 = vmatpush.xpose.msra.mxu0 0.0
    %207 = vmatpush.xpose.msra.mxu0 %v190
    %208 = vmatmul.f32.gmra.mxu0 %v190
    %v209 = vpop.f32.mrf.mxu0
    %v210 = vadd.f32 0.0, %v209
    %211 = vdwg.mxu0
    %vm212 = vcmp.gt.f32.partialorder %v187, 0.17364818
    %vm213 = vcmp.gt.f32.partialorder %v210, 0.17364818
    %v214 = vsel %vm212, %v187, -9e+15
    %v215 = vsel %vm213, %v210, -9e+15
    %v216 = vmul.f32 %v214, 10.0
    %v217 = vmul.f32 %v215, 10.0
    %v218 = vmul.f32 %v216, 1.442695
    %v219 = vpow.pop %v218
    %v220 = vmul.f32 %v217, 1.442695
    %v221 = vpow.pop %v220
    %vm222 = vcmask 64512
    %v223 = vsel %vm222, %v219, 0.0
    %224 = vadd.xlane.f32.xlu0 %v223
    %v225 = vpop.xlane.xlu0 %224
    %v226 = vsel %vm222, %v221, 0.0
    %227 = vadd.xlane.f32.xlu0 %v226
    %v228 = vpop.xlane.xlu0 %227
    %v229 = vrcp.pop %v225
    %v230 = vrcp.pop %v228
    %v231 = vmul.f32 %v219, %v229
    %v232 = vmul.f32 %v221, %v230
    %v234 = vsel %vm222, %v231, 0
    %236 = vmatpush.msra.mxu0 0.0
    %237 = vmatpush.msra.mxu0 0.0
    %238 = vmatpush.msra.mxu0 0.0
    %239 = vmatpush.msra.mxu0 0.0
    %240 = vmatpush.msra.mxu0 0.0
    %241 = vmatpush.msra.mxu0 0.0
    %242 = vmatpush.msra.mxu0 0.0
    %243 = vmatpush.msra.mxu0 0.0
    %244 = vmatpush.msra.mxu0 0.0
    %245 = vmatpush.msra.mxu0 0.0
    %246 = vmatpush.msra.mxu0 0.0
    %247 = vmatpush.msra.mxu0 0.0
    %248 = vmatpush.msra.mxu0 0.0
    %249 = vmatpush.msra.mxu0 0.0
    %250 = vmatpush.msra.mxu0 0.0
    %251 = vmatpush.msra.mxu0 %v86
    %252 = vmatmul.f32.gmra.mxu0 %v234
    %v253 = vpop.f32.mrf.mxu0
    %v254 = vadd.f32 0.0, %v253
    %255 = vdwg.mxu0
    %v257 = vsel %vm222, %v232, 0
    %259 = vmatpush.msra.mxu0 0.0
    %260 = vmatpush.msra.mxu0 0.0
    %261 = vmatpush.msra.mxu0 0.0
    %262 = vmatpush.msra.mxu0 0.0
    %263 = vmatpush.msra.mxu0 0.0
    %264 = vmatpush.msra.mxu0 0.0
    %265 = vmatpush.msra.mxu0 0.0
    %266 = vmatpush.msra.mxu0 0.0
    %267 = vmatpush.msra.mxu0 0.0
    %268 = vmatpush.msra.mxu0 0.0
    %269 = vmatpush.msra.mxu0 0.0
    %270 = vmatpush.msra.mxu0 0.0
    %271 = vmatpush.msra.mxu0 0.0
    %272 = vmatpush.msra.mxu0 0.0
    %273 = vmatpush.msra.mxu0 0.0
    %274 = vmatpush.msra.mxu0 %v84
    %275 = vmatmul.f32.gmra.mxu0 %v257
    %v276 = vpop.f32.mrf.mxu0
    %v277 = vadd.f32 0.0, %v276
    %278 = vdwg.mxu0
    %280 = vrot.lane.b32.xlu0 %v277, 32
    %v281 = vpop.permute.xlu0 %280
    %v283 = vsel %vm87, %v254, %v281
    %v284 = vld [vmem:[%s0] sm:$0xff]
    %v286 = vsel %vm62, %v284, 0
    %288 = vmatpush.msra.mxu0 0.0
    %289 = vmatpush.msra.mxu0 0.0
    %290 = vmatpush.msra.mxu0 0.0
    %291 = vmatpush.msra.mxu0 0.0
    %292 = vmatpush.msra.mxu0 0.0
    %293 = vmatpush.msra.mxu0 0.0
    %294 = vmatpush.msra.mxu0 0.0
    %295 = vmatpush.msra.mxu0 0.0
    %296 = vmatpush.msra.mxu0 %v49
    %297 = vmatpush.msra.mxu0 %v48
    %298 = vmatpush.msra.mxu0 %v47
    %299 = vmatpush.msra.mxu0 %v46
    %300 = vmatpush.msra.mxu0 %v45
    %301 = vmatpush.msra.mxu0 %v44
    %302 = vmatpush.msra.mxu0 %v43
    %303 = vmatpush.msra.mxu0 %v42
    %304 = vmatmul.f32.gmra.mxu0 %v286
    %v305 = vpop.f32.mrf.mxu0
    %v306 = vadd.f32 0.0, %v305
    %307 = vdwg.mxu0
    %v308 = vperm.slane %v58, 0
    %v310 = vsel %vm62, %v283, 0
    %312 = vmatpush.msra.mxu0 0.0
    %313 = vmatpush.msra.mxu0 0.0
    %314 = vmatpush.msra.mxu0 0.0
    %315 = vmatpush.msra.mxu0 0.0
    %316 = vmatpush.msra.mxu0 0.0
    %317 = vmatpush.msra.mxu0 0.0
    %318 = vmatpush.msra.mxu0 0.0
    %319 = vmatpush.msra.mxu0 0.0
    %320 = vmatpush.msra.mxu0 %v57
    %321 = vmatpush.msra.mxu0 %v56
    %322 = vmatpush.msra.mxu0 %v55
    %323 = vmatpush.msra.mxu0 %v54
    %324 = vmatpush.msra.mxu0 %v53
    %325 = vmatpush.msra.mxu0 %v52
    %326 = vmatpush.msra.mxu0 %v51
    %327 = vmatpush.msra.mxu0 %v50
    %328 = vmatmul.f32.gmra.mxu0 %v310
    %v329 = vpop.f32.mrf.mxu0
    %v330 = vadd.f32 %v308, %v329
    %331 = vdwg.mxu0
    %v333 = vrot.slane %v306, 1
    %v334 = vrot.slane %v306, 2
    %v335 = vrot.slane %v306, 3
    %v336 = vrot.slane %v306, 4
    %v337 = vrot.slane %v306, 5
    %v338 = vrot.slane %v306, 6
    %v339 = vrot.slane %v306, 7
    %v340 = vperm.slane %v306, 0
    %v341 = vperm.slane %v333, 0
    %v342 = vperm.slane %v334, 0
    %v343 = vperm.slane %v335, 0
    %v344 = vperm.slane %v336, 0
    %v345 = vperm.slane %v337, 0
    %v346 = vperm.slane %v338, 0
    %v347 = vperm.slane %v339, 0
    %v356 = vadd.f32 %v340, %v330
    %v357 = vadd.f32 %v341, %v330
    %v358 = vadd.f32 %v342, %v330
    %v359 = vadd.f32 %v343, %v330
    %v360 = vadd.f32 %v344, %v330
    %v361 = vadd.f32 %v345, %v330
    %v362 = vadd.f32 %v346, %v330
    %v363 = vadd.f32 %v347, %v330
    %v364 = vmax.f32 %v356, 0.0
    %v365 = vmax.f32 %v357, 0.0
    %v366 = vmax.f32 %v358, 0.0
    %v367 = vmax.f32 %v359, 0.0
    %v368 = vmax.f32 %v360, 0.0
    %v369 = vmax.f32 %v361, 0.0
    %v370 = vmax.f32 %v362, 0.0
    %v371 = vmax.f32 %v363, 0.0
    %v372 = vperm.slane %v59, 0
    %v373 = vmul.f32 %v364, %v372
    %v374 = vmul.f32 %v365, %v372
    %v375 = vmul.f32 %v366, %v372
    %v376 = vmul.f32 %v367, %v372
    %v377 = vmul.f32 %v368, %v372
    %v378 = vmul.f32 %v369, %v372
    %v379 = vmul.f32 %v370, %v372
    %v380 = vmul.f32 %v371, %v372
    %v381 = vsel %vm62, %v373, 0.0
    %382 = vadd.xlane.f32.xlu0 %v381
    %v383 = vpop.xlane.xlu0 %382
    %v384 = vsel %vm62, %v374, 0.0
    %385 = vadd.xlane.f32.xlu0 %v384
    %v386 = vpop.xlane.xlu0 %385
    %v387 = vsel %vm62, %v375, 0.0
    %388 = vadd.xlane.f32.xlu0 %v387
    %v389 = vpop.xlane.xlu0 %388
    %v390 = vsel %vm62, %v376, 0.0
    %391 = vadd.xlane.f32.xlu0 %v390
    %v392 = vpop.xlane.xlu0 %391
    %v393 = vsel %vm62, %v377, 0.0
    %394 = vadd.xlane.f32.xlu0 %v393
    %v395 = vpop.xlane.xlu0 %394
    %v396 = vsel %vm62, %v378, 0.0
    %397 = vadd.xlane.f32.xlu0 %v396
    %v398 = vpop.xlane.xlu0 %397
    %v399 = vsel %vm62, %v379, 0.0
    %400 = vadd.xlane.f32.xlu0 %v399
    %v401 = vpop.xlane.xlu0 %400
    %v402 = vsel %vm62, %v380, 0.0
    %403 = vadd.xlane.f32.xlu0 %v402
    %v404 = vpop.xlane.xlu0 %403
    %s405 = sld [smem:[#allocation2]]
    %v406 = vstv %s405
    %v407 = vadd.f32 %v383, %v406
    %v408 = vadd.f32 %v386, %v406
    %v409 = vadd.f32 %v389, %v406
    %v410 = vadd.f32 %v392, %v406
    %v411 = vadd.f32 %v395, %v406
    %v412 = vadd.f32 %v398, %v406
    %v413 = vadd.f32 %v401, %v406
    %v414 = vadd.f32 %v404, %v406
    %v423 = vlaneseq
    %v424 = vand.u32 %v423, 127
    %v425 = vperm.slane %v407, %v424
    %v426 = vperm.slane %v408, %v424
    %v427 = vperm.slane %v409, %v424
    %v428 = vperm.slane %v410, %v424
    %v429 = vperm.slane %v411, %v424
    %v430 = vperm.slane %v412, %v424
    %v431 = vperm.slane %v413, %v424
    %v432 = vperm.slane %v414, %v424
    %vm433 = vcmask 1041409
    %v434 = vsel %vm433, %v426, %v425
    %vm435 = vcmask 1042434
    %v436 = vsel %vm435, %v427, %v434
    %vm437 = vcmask 1043459
    %v438 = vsel %vm437, %v428, %v436
    %vm439 = vcmask 1044484
    %v440 = vsel %vm439, %v429, %v438
    %vm441 = vcmask 1045509
    %v442 = vsel %vm441, %v430, %v440
    %vm443 = vcmask 1046534
    %v444 = vsel %vm443, %v431, %v442
    %vm445 = vcmask 1047559
    %v446 = vsel %vm445, %v432, %v444
    %448 = vst.msk [vmem:[#allocation3] sm:$0xff] %vm222, %v446
    // Predicated region
    $region26: #{ipn_forward.1} parent=1 // pred_check
      _
    $region27: #{ipn_forward.1} parent=1 // pred_check_branch
      %450 = sbr.rel (0) target = $region29
    $region28: #{ipn_forward.1} parent=1 // pred_region
      %452 = vsyncadd [#allocation4], 0
      %s454 = sshll.u32 [#allocation3], 4
      %s455 = int_to_ptr.vmem [resolvable:$true] %s454
      %s456 = sshll.u32 %s6, 4
      %s457 = int_to_ptr.hbm [resolvable:$true] %s456
      %459 = dma.vmem_to_hbm [thread:$0]  %s455, 128, %s457, [#allocation4]
    $region29: #{ipn_forward.1} parent=1 // pred_fallthru
      _
    // Predicated region
    $region30: #{ipn_forward.1} parent=1 // pred_check
      _
    $region31: #{ipn_forward.1} parent=1 // pred_check_branch
      %461 = sbr.rel (0) target = $region33
    $region32: #{ipn_forward.1} parent=1 // pred_region
      %463 = dma.done [#allocation4], 128
    $region33: #{ipn_forward.1} parent=1 // pred_fallthru
      _
    %464 = vsyncpa [#allocation4], 1

</llo_original>
